<compile_context>
chip_gen: v5e
topology: v5e:2x2
jax: 0.10.0
libtpu: 0.0.40
codegen_flags: <defaults>
</compile_context>

<pallas_src>
import jax
import jax.numpy as jnp
from jax import lax
from jax.experimental import pallas as pl
from jax.experimental.pallas import tpu as pltpu


def _mha_kernel(x_ref, bias_ref, wqkv_ref, bqkv_ref, wo_ref, bo_ref, out_ref):
    Bt, S, E = x_ref.shape
    H, D, _ = wo_ref.shape
    cdt = wqkv_ref.dtype          # MXU compute dtype (bf16); accumulation is f32

    # ---- fused QKV projection on flattened (Bt*S, E) activations -------------
    x2 = x_ref[...].reshape(Bt * S, E).astype(cdt)        # leading-dim merge only
    qkv = jnp.dot(x2, wqkv_ref[...],
                  preferred_element_type=jnp.float32) + bqkv_ref[...]   # (Bt*S, 3E) f32
    q_all = qkv[:, 0:E]            # 1/sqrt(D) already folded in on the host
    k_all = qkv[:, E:2 * E]        # 128-lane-aligned slices when E % 128 == 0
    v_all = qkv[:, 2 * E:3 * E]

    bias_all = bias_ref[...]       # (Bt, 1, S) additive mask bias, f32
    bo_row = bo_ref[...]           # (1, E) f32

    for b in range(Bt):            # static: Bt is a small trace-time constant
        r0 = b * S
        # mask-bias broadcast hoisted out of the per-head loop
        bias_mat = jnp.broadcast_to(bias_all[b], (S, S))          # (S, S)
        acc = jnp.broadcast_to(bo_row, (S, E))                    # start from bo

        for h in range(H):         # static unrolled head loop, clean 2-D MXU ops
            c0 = h * D
            qh = q_all[r0:r0 + S, c0:c0 + D].astype(cdt)          # (S, D)
            kh = k_all[r0:r0 + S, c0:c0 + D].astype(cdt)
            vh = v_all[r0:r0 + S, c0:c0 + D].astype(cdt)

            # scores = (q / sqrt(D)) @ k^T  (contract on d; scale pre-folded)
            s = lax.dot_general(qh, kh, (((1,), (1,)), ((), ())),
                                preferred_element_type=jnp.float32)      # (S, S)
            s = s + bias_mat

            # numerically stable softmax in f32
            m = jnp.max(s, axis=-1, keepdims=True)
            e = jnp.exp(s - m)
            p = e * pl.reciprocal(jnp.sum(e, axis=-1, keepdims=True), approx=True)

            ctx = jnp.dot(p.astype(cdt), vh,
                          preferred_element_type=jnp.float32)            # (S, D)
            # per-head accumulated output projection: no concat of head chunks
            acc = acc + jnp.dot(ctx.astype(cdt), wo_ref[h],
                                preferred_element_type=jnp.float32)      # (S, E)

        out_ref[b] = acc.astype(out_ref.dtype)   # lane-dense store when E % 128 == 0


def multi_head_attention(x, attention_mask, params, num_heads, *,
                         block_b=None, compute_dtype=jnp.bfloat16):
    """x: (B, S, E) f32; attention_mask: (B, S) with 1 = keep, 0 = mask (or None)."""
    B, S, E = x.shape
    assert E % num_heads == 0, "embed_dim must be divisible by num_heads"
    D = E // num_heads
    wq, bq, wk, bk, wv, bv, wo, bo = params

    # ---- host-side weight prep: pre-transpose, fuse QKV, fold the scale ------
    scale = 1.0 / float(D) ** 0.5
    w_qkv = jnp.concatenate([wq.T * scale, wk.T, wv.T], axis=1).astype(compute_dtype)  # (E, 3E)
    b_qkv = jnp.concatenate([bq * scale, bk, bv])[None, :].astype(jnp.float32)         # (1, 3E)
    wo_heads = wo.T.reshape(num_heads, D, E).astype(compute_dtype)                     # (H, D, E)
    bo_row = bo[None, :].astype(jnp.float32)                                           # (1, E)

    if attention_mask is None:
        bias = jnp.zeros((B, 1, S), jnp.float32)
    else:
        bias = ((1.0 - attention_mask) * -10000.0).astype(jnp.float32).reshape(B, 1, S)

    if block_b is None:
        block_b = max(1, B // 2)      # <= 2 grid steps: one per TensorCore on v7x
    while B % block_b:                # keep the grid exact
        block_b -= 1
    grid = (B // block_b,)

    return pl.pallas_call(
        _mha_kernel,
        out_shape=jax.ShapeDtypeStruct((B, S, E), x.dtype),
        grid_spec=pltpu.PrefetchScalarGridSpec(
            num_scalar_prefetch=0,
            grid=grid,
            in_specs=[
                pl.BlockSpec((block_b, S, E), lambda i: (i, 0, 0)),     # x
                pl.BlockSpec((block_b, 1, S), lambda i: (i, 0, 0)),     # mask bias
                pl.BlockSpec((E, 3 * E), lambda i: (0, 0)),             # fused Wqkv (resident)
                pl.BlockSpec((1, 3 * E), lambda i: (0, 0)),             # fused bqkv
                pl.BlockSpec((num_heads, D, E), lambda i: (0, 0, 0)),   # Wo per head (resident)
                pl.BlockSpec((1, E), lambda i: (0, 0)),                 # bo
            ],
            out_specs=pl.BlockSpec((block_b, S, E), lambda i: (i, 0, 0)),
        ),
        compiler_params=pltpu.CompilerParams(
            dimension_semantics=("parallel",)),
    )(x, bias, w_qkv, b_qkv, wo_heads, bo_row)


def _reference_mha(x, attention_mask, params, num_heads):
    """Pure-JAX f32 reference mirroring the PyTorch forward (eval mode)."""
    wq, bq, wk, bk, wv, bv, wo, bo = params
    B, S, E = x.shape
    D = E // num_heads

    def proj(w, b):
        return (x @ w.T + b).reshape(B, S, num_heads, D).transpose(0, 2, 1, 3)

    q, k, v = proj(wq, bq), proj(wk, bk), proj(wv, bv)
    scores = jnp.einsum('bhqd,bhkd->bhqk', q, k) / jnp.sqrt(jnp.float32(D))
    ext = (1.0 - attention_mask)[:, None, None, :] * -10000.0
    scores = scores + ext
    p = jax.nn.softmax(scores, axis=-1)
    ctx = jnp.einsum('bhqk,bhkd->bhqd', p, v)
    ctx = ctx.transpose(0, 2, 1, 3).reshape(B, S, E)
    return ctx @ wo.T + bo


if __name__ == "__main__":
    # Config: embed_dim=128, num_heads=4 (head_dim=32), dropout_prob=0 (eval),
    # batch=2, seq=16.  E = 128 keeps MXU shapes and output stores lane-dense.
    B, S, E, H = 2, 16, 128, 4

    key = jax.random.PRNGKey(0)
    keys = jax.random.split(key, 10)

    def linear_params(kw, kb):
        w = jax.random.normal(kw, (E, E), jnp.float32) * 0.05
        b = jax.random.normal(kb, (E,), jnp.float32) * 0.05
        return w, b

    wq, bq = linear_params(keys[0], keys[1])
    wk, bk = linear_params(keys[2], keys[3])
    wv, bv = linear_params(keys[4], keys[5])
    wo, bo = linear_params(keys[6], keys[7])
    params = (wq, bq, wk, bk, wv, bv, wo, bo)

    x = jax.random.normal(keys[8], (B, S, E), jnp.float32)
    # mask: keep the first 12 positions of each sequence, mask the rest
    attention_mask = jnp.broadcast_to(
        (jnp.arange(S)[None, :] < 12), (B, S)).astype(jnp.float32)

    out = multi_head_attention(x, attention_mask, params, H)
    out = jax.block_until_ready(out)

    ref = _reference_mha(x, attention_mask, params, H)
    assert out.shape == (B, S, E)
    # bf16 MXU operands with f32 accumulation -> slightly looser tolerance vs f32 ref
    assert jnp.allclose(out, ref, atol=3e-2, rtol=3e-2), "mismatch vs pure-JAX reference"

    print("KERNEL_OK")
</pallas_src>

<mosaic_0001>
module attributes {stable_mosaic.version = 11 : i64} {
  func.func @_mha_kernel(%arg0: i32, %arg1: memref<1x16x128xf32, #tpu.memory_space<vmem>>, %arg2: memref<1x1x16xf32, #tpu.memory_space<vmem>>, %arg3: memref<128x384xbf16, #tpu.memory_space<vmem>>, %arg4: memref<1x384xf32, #tpu.memory_space<vmem>>, %arg5: memref<4x32x128xbf16, #tpu.memory_space<vmem>>, %arg6: memref<1x128xf32, #tpu.memory_space<vmem>>, %arg7: memref<1x16x128xf32, #tpu.memory_space<vmem>>) attributes {dimension_semantics = [#tpu.dimension_semantics<parallel>], iteration_bounds = array<i64: 2>, scalar_prefetch = 0 : i64, scratch_operands = 0 : i64, tpu.core_type = #tpu.core_type<tc>, window_params = [{transform_indices = @transform_0, window_bounds = array<i64: 1, 16, 128>}, {transform_indices = @transform_1, window_bounds = array<i64: 1, 1, 16>}, {pipeline_mode = #tpu.pipeline_mode<synchronous>, transform_indices = @transform_2, window_bounds = array<i64: 128, 384>}, {pipeline_mode = #tpu.pipeline_mode<synchronous>, transform_indices = @transform_3, window_bounds = array<i64: 1, 384>}, {pipeline_mode = #tpu.pipeline_mode<synchronous>, transform_indices = @transform_4, window_bounds = array<i64: 4, 32, 128>}, {pipeline_mode = #tpu.pipeline_mode<synchronous>, transform_indices = @transform_5, window_bounds = array<i64: 1, 128>}, {transform_indices = @transform_6, window_bounds = array<i64: 1, 16, 128>}]} {
    %c0 = arith.constant 0 : index
    %c0_0 = arith.constant 0 : index
    %c0_1 = arith.constant 0 : index
    %0 = vector.load %arg1[%c0, %c0_0, %c0_1] : memref<1x16x128xf32, #tpu.memory_space<vmem>>, vector<1x16x128xf32>
    %1 = vector.shape_cast %0 : vector<1x16x128xf32> to vector<16x128xf32>
    %2 = arith.truncf %1 : vector<16x128xf32> to vector<16x128xbf16>
    %c0_2 = arith.constant 0 : index
    %c0_3 = arith.constant 0 : index
    %3 = vector.load %arg3[%c0_2, %c0_3] : memref<128x384xbf16, #tpu.memory_space<vmem>>, vector<128x384xbf16>
    %cst = arith.constant dense<0.000000e+00> : vector<16x384xf32>
    %4 = tpu.matmul %2, %3, %cst {dimension_numbers = #tpu.dot_dimension_numbers<[1], [0], [0], [1], [0, 0, 1, 1], [], []>} : vector<16x128xbf16>, vector<128x384xbf16>, vector<16x384xf32> -> vector<16x384xf32>
    %c0_4 = arith.constant 0 : index
    %c0_5 = arith.constant 0 : index
    %5 = vector.load %arg4[%c0_4, %c0_5] : memref<1x384xf32, #tpu.memory_space<vmem>>, vector<1x384xf32>
    %6 = vector.broadcast %5 : vector<1x384xf32> to vector<16x384xf32>
    %7 = arith.addf %4, %6 : vector<16x384xf32>
    %8 = vector.extract_strided_slice %7 {offsets = [0, 0], sizes = [16, 128], strides = [1, 1]} : vector<16x384xf32> to vector<16x128xf32>
    %9 = vector.extract_strided_slice %7 {offsets = [0, 128], sizes = [16, 128], strides = [1, 1]} : vector<16x384xf32> to vector<16x128xf32>
    %10 = vector.extract_strided_slice %7 {offsets = [0, 256], sizes = [16, 128], strides = [1, 1]} : vector<16x384xf32> to vector<16x128xf32>
    %c0_6 = arith.constant 0 : index
    %c0_7 = arith.constant 0 : index
    %c0_8 = arith.constant 0 : index
    %11 = vector.load %arg2[%c0_6, %c0_7, %c0_8] : memref<1x1x16xf32, #tpu.memory_space<vmem>>, vector<1x1x16xf32>
    %c0_9 = arith.constant 0 : index
    %c0_10 = arith.constant 0 : index
    %12 = vector.load %arg6[%c0_9, %c0_10] : memref<1x128xf32, #tpu.memory_space<vmem>>, vector<1x128xf32>
    %13 = vector.shape_cast %11 : vector<1x1x16xf32> to vector<1x16xf32>
    %14 = vector.shape_cast %13 : vector<1x16xf32> to vector<1x16xf32>
    %15 = vector.broadcast %14 : vector<1x16xf32> to vector<16x16xf32>
    %16 = vector.shape_cast %12 : vector<1x128xf32> to vector<1x128xf32>
    %17 = vector.broadcast %16 : vector<1x128xf32> to vector<16x128xf32>
    %18 = vector.extract_strided_slice %8 {offsets = [0, 0], sizes = [16, 32], strides = [1, 1]} : vector<16x128xf32> to vector<16x32xf32>
    %19 = arith.truncf %18 : vector<16x32xf32> to vector<16x32xbf16>
    %20 = vector.extract_strided_slice %9 {offsets = [0, 0], sizes = [16, 32], strides = [1, 1]} : vector<16x128xf32> to vector<16x32xf32>
    %21 = arith.truncf %20 : vector<16x32xf32> to vector<16x32xbf16>
    %22 = vector.extract_strided_slice %10 {offsets = [0, 0], sizes = [16, 32], strides = [1, 1]} : vector<16x128xf32> to vector<16x32xf32>
    %23 = arith.truncf %22 : vector<16x32xf32> to vector<16x32xbf16>
    %cst_11 = arith.constant dense<0.000000e+00> : vector<16x16xf32>
    %24 = tpu.matmul %19, %21, %cst_11 {dimension_numbers = #tpu.dot_dimension_numbers<[1], [1], [0], [0], [0, 0, 1, 0], [], []>} : vector<16x32xbf16>, vector<16x32xbf16>, vector<16x16xf32> -> vector<16x16xf32>
    %25 = arith.addf %24, %15 : vector<16x16xf32>
    %cst_12 = arith.constant dense<0xFF800000> : vector<16xf32>
    %26 = vector.multi_reduction <maximumf>, %25, %cst_12 [1] : vector<16x16xf32> to vector<16xf32>
    %27 = vector.shape_cast %26 : vector<16xf32> to vector<16x1xf32>
    %28 = vector.broadcast %27 : vector<16x1xf32> to vector<16x16xf32>
    %29 = arith.subf %25, %28 : vector<16x16xf32>
    %30 = math.exp %29 : vector<16x16xf32>
    %cst_13 = arith.constant dense<0.000000e+00> : vector<16xf32>
    %31 = vector.multi_reduction <add>, %30, %cst_13 [1] : vector<16x16xf32> to vector<16xf32>
    %32 = vector.shape_cast %31 : vector<16xf32> to vector<16x1xf32>
    %33 = tpu.reciprocal %32 {approx = true} : vector<16x1xf32> -> vector<16x1xf32>
    %34 = vector.broadcast %33 : vector<16x1xf32> to vector<16x16xf32>
    %35 = arith.mulf %30, %34 : vector<16x16xf32>
    %36 = arith.truncf %35 : vector<16x16xf32> to vector<16x16xbf16>
    %cst_14 = arith.constant dense<0.000000e+00> : vector<16x32xf32>
    %37 = tpu.matmul %36, %23, %cst_14 {dimension_numbers = #tpu.dot_dimension_numbers<[1], [0], [0], [1], [0, 0, 1, 1], [], []>} : vector<16x16xbf16>, vector<16x32xbf16>, vector<16x32xf32> -> vector<16x32xf32>
    %38 = arith.truncf %37 : vector<16x32xf32> to vector<16x32xbf16>
    %c0_15 = arith.constant 0 : index
    %c0_16 = arith.constant 0 : index
    %c0_17 = arith.constant 0 : index
    %39 = vector.load %arg5[%c0_15, %c0_16, %c0_17] : memref<4x32x128xbf16, #tpu.memory_space<vmem>>, vector<1x32x128xbf16>
    %40 = vector.shape_cast %39 : vector<1x32x128xbf16> to vector<32x128xbf16>
    %cst_18 = arith.constant dense<0.000000e+00> : vector<16x128xf32>
    %41 = tpu.matmul %38, %40, %cst_18 {dimension_numbers = #tpu.dot_dimension_numbers<[1], [0], [0], [1], [0, 0, 1, 1], [], []>} : vector<16x32xbf16>, vector<32x128xbf16>, vector<16x128xf32> -> vector<16x128xf32>
    %42 = arith.addf %17, %41 : vector<16x128xf32>
    %43 = vector.extract_strided_slice %8 {offsets = [0, 32], sizes = [16, 32], strides = [1, 1]} : vector<16x128xf32> to vector<16x32xf32>
    %44 = arith.truncf %43 : vector<16x32xf32> to vector<16x32xbf16>
    %45 = vector.extract_strided_slice %9 {offsets = [0, 32], sizes = [16, 32], strides = [1, 1]} : vector<16x128xf32> to vector<16x32xf32>
    %46 = arith.truncf %45 : vector<16x32xf32> to vector<16x32xbf16>
    %47 = vector.extract_strided_slice %10 {offsets = [0, 32], sizes = [16, 32], strides = [1, 1]} : vector<16x128xf32> to vector<16x32xf32>
    %48 = arith.truncf %47 : vector<16x32xf32> to vector<16x32xbf16>
    %cst_19 = arith.constant dense<0.000000e+00> : vector<16x16xf32>
    %49 = tpu.matmul %44, %46, %cst_19 {dimension_numbers = #tpu.dot_dimension_numbers<[1], [1], [0], [0], [0, 0, 1, 0], [], []>} : vector<16x32xbf16>, vector<16x32xbf16>, vector<16x16xf32> -> vector<16x16xf32>
    %50 = arith.addf %49, %15 : vector<16x16xf32>
    %cst_20 = arith.constant dense<0xFF800000> : vector<16xf32>
    %51 = vector.multi_reduction <maximumf>, %50, %cst_20 [1] : vector<16x16xf32> to vector<16xf32>
    %52 = vector.shape_cast %51 : vector<16xf32> to vector<16x1xf32>
    %53 = vector.broadcast %52 : vector<16x1xf32> to vector<16x16xf32>
    %54 = arith.subf %50, %53 : vector<16x16xf32>
    %55 = math.exp %54 : vector<16x16xf32>
    %cst_21 = arith.constant dense<0.000000e+00> : vector<16xf32>
    %56 = vector.multi_reduction <add>, %55, %cst_21 [1] : vector<16x16xf32> to vector<16xf32>
    %57 = vector.shape_cast %56 : vector<16xf32> to vector<16x1xf32>
    %58 = tpu.reciprocal %57 {approx = true} : vector<16x1xf32> -> vector<16x1xf32>
    %59 = vector.broadcast %58 : vector<16x1xf32> to vector<16x16xf32>
    %60 = arith.mulf %55, %59 : vector<16x16xf32>
    %61 = arith.truncf %60 : vector<16x16xf32> to vector<16x16xbf16>
    %cst_22 = arith.constant dense<0.000000e+00> : vector<16x32xf32>
    %62 = tpu.matmul %61, %48, %cst_22 {dimension_numbers = #tpu.dot_dimension_numbers<[1], [0], [0], [1], [0, 0, 1, 1], [], []>} : vector<16x16xbf16>, vector<16x32xbf16>, vector<16x32xf32> -> vector<16x32xf32>
    %63 = arith.truncf %62 : vector<16x32xf32> to vector<16x32xbf16>
    %c1 = arith.constant 1 : index
    %c0_23 = arith.constant 0 : index
    %c0_24 = arith.constant 0 : index
    %64 = vector.load %arg5[%c1, %c0_23, %c0_24] : memref<4x32x128xbf16, #tpu.memory_space<vmem>>, vector<1x32x128xbf16>
    %65 = vector.shape_cast %64 : vector<1x32x128xbf16> to vector<32x128xbf16>
    %cst_25 = arith.constant dense<0.000000e+00> : vector<16x128xf32>
    %66 = tpu.matmul %63, %65, %cst_25 {dimension_numbers = #tpu.dot_dimension_numbers<[1], [0], [0], [1], [0, 0, 1, 1], [], []>} : vector<16x32xbf16>, vector<32x128xbf16>, vector<16x128xf32> -> vector<16x128xf32>
    %67 = arith.addf %42, %66 : vector<16x128xf32>
    %68 = vector.extract_strided_slice %8 {offsets = [0, 64], sizes = [16, 32], strides = [1, 1]} : vector<16x128xf32> to vector<16x32xf32>
    %69 = arith.truncf %68 : vector<16x32xf32> to vector<16x32xbf16>
    %70 = vector.extract_strided_slice %9 {offsets = [0, 64], sizes = [16, 32], strides = [1, 1]} : vector<16x128xf32> to vector<16x32xf32>
    %71 = arith.truncf %70 : vector<16x32xf32> to vector<16x32xbf16>
    %72 = vector.extract_strided_slice %10 {offsets = [0, 64], sizes = [16, 32], strides = [1, 1]} : vector<16x128xf32> to vector<16x32xf32>
    %73 = arith.truncf %72 : vector<16x32xf32> to vector<16x32xbf16>
    %cst_26 = arith.constant dense<0.000000e+00> : vector<16x16xf32>
    %74 = tpu.matmul %69, %71, %cst_26 {dimension_numbers = #tpu.dot_dimension_numbers<[1], [1], [0], [0], [0, 0, 1, 0], [], []>} : vector<16x32xbf16>, vector<16x32xbf16>, vector<16x16xf32> -> vector<16x16xf32>
    %75 = arith.addf %74, %15 : vector<16x16xf32>
    %cst_27 = arith.constant dense<0xFF800000> : vector<16xf32>
    %76 = vector.multi_reduction <maximumf>, %75, %cst_27 [1] : vector<16x16xf32> to vector<16xf32>
    %77 = vector.shape_cast %76 : vector<16xf32> to vector<16x1xf32>
    %78 = vector.broadcast %77 : vector<16x1xf32> to vector<16x16xf32>
    %79 = arith.subf %75, %78 : vector<16x16xf32>
    %80 = math.exp %79 : vector<16x16xf32>
    %cst_28 = arith.constant dense<0.000000e+00> : vector<16xf32>
    %81 = vector.multi_reduction <add>, %80, %cst_28 [1] : vector<16x16xf32> to vector<16xf32>
    %82 = vector.shape_cast %81 : vector<16xf32> to vector<16x1xf32>
    %83 = tpu.reciprocal %82 {approx = true} : vector<16x1xf32> -> vector<16x1xf32>
    %84 = vector.broadcast %83 : vector<16x1xf32> to vector<16x16xf32>
    %85 = arith.mulf %80, %84 : vector<16x16xf32>
    %86 = arith.truncf %85 : vector<16x16xf32> to vector<16x16xbf16>
    %cst_29 = arith.constant dense<0.000000e+00> : vector<16x32xf32>
    %87 = tpu.matmul %86, %73, %cst_29 {dimension_numbers = #tpu.dot_dimension_numbers<[1], [0], [0], [1], [0, 0, 1, 1], [], []>} : vector<16x16xbf16>, vector<16x32xbf16>, vector<16x32xf32> -> vector<16x32xf32>
    %88 = arith.truncf %87 : vector<16x32xf32> to vector<16x32xbf16>
    %c2 = arith.constant 2 : index
    %c0_30 = arith.constant 0 : index
    %c0_31 = arith.constant 0 : index
    %89 = vector.load %arg5[%c2, %c0_30, %c0_31] : memref<4x32x128xbf16, #tpu.memory_space<vmem>>, vector<1x32x128xbf16>
    %90 = vector.shape_cast %89 : vector<1x32x128xbf16> to vector<32x128xbf16>
    %cst_32 = arith.constant dense<0.000000e+00> : vector<16x128xf32>
    %91 = tpu.matmul %88, %90, %cst_32 {dimension_numbers = #tpu.dot_dimension_numbers<[1], [0], [0], [1], [0, 0, 1, 1], [], []>} : vector<16x32xbf16>, vector<32x128xbf16>, vector<16x128xf32> -> vector<16x128xf32>
    %92 = arith.addf %67, %91 : vector<16x128xf32>
    %93 = vector.extract_strided_slice %8 {offsets = [0, 96], sizes = [16, 32], strides = [1, 1]} : vector<16x128xf32> to vector<16x32xf32>
    %94 = arith.truncf %93 : vector<16x32xf32> to vector<16x32xbf16>
    %95 = vector.extract_strided_slice %9 {offsets = [0, 96], sizes = [16, 32], strides = [1, 1]} : vector<16x128xf32> to vector<16x32xf32>
    %96 = arith.truncf %95 : vector<16x32xf32> to vector<16x32xbf16>
    %97 = vector.extract_strided_slice %10 {offsets = [0, 96], sizes = [16, 32], strides = [1, 1]} : vector<16x128xf32> to vector<16x32xf32>
    %98 = arith.truncf %97 : vector<16x32xf32> to vector<16x32xbf16>
    %cst_33 = arith.constant dense<0.000000e+00> : vector<16x16xf32>
    %99 = tpu.matmul %94, %96, %cst_33 {dimension_numbers = #tpu.dot_dimension_numbers<[1], [1], [0], [0], [0, 0, 1, 0], [], []>} : vector<16x32xbf16>, vector<16x32xbf16>, vector<16x16xf32> -> vector<16x16xf32>
    %100 = arith.addf %99, %15 : vector<16x16xf32>
    %cst_34 = arith.constant dense<0xFF800000> : vector<16xf32>
    %101 = vector.multi_reduction <maximumf>, %100, %cst_34 [1] : vector<16x16xf32> to vector<16xf32>
    %102 = vector.shape_cast %101 : vector<16xf32> to vector<16x1xf32>
    %103 = vector.broadcast %102 : vector<16x1xf32> to vector<16x16xf32>
    %104 = arith.subf %100, %103 : vector<16x16xf32>
    %105 = math.exp %104 : vector<16x16xf32>
    %cst_35 = arith.constant dense<0.000000e+00> : vector<16xf32>
    %106 = vector.multi_reduction <add>, %105, %cst_35 [1] : vector<16x16xf32> to vector<16xf32>
    %107 = vector.shape_cast %106 : vector<16xf32> to vector<16x1xf32>
    %108 = tpu.reciprocal %107 {approx = true} : vector<16x1xf32> -> vector<16x1xf32>
    %109 = vector.broadcast %108 : vector<16x1xf32> to vector<16x16xf32>
    %110 = arith.mulf %105, %109 : vector<16x16xf32>
    %111 = arith.truncf %110 : vector<16x16xf32> to vector<16x16xbf16>
    %cst_36 = arith.constant dense<0.000000e+00> : vector<16x32xf32>
    %112 = tpu.matmul %111, %98, %cst_36 {dimension_numbers = #tpu.dot_dimension_numbers<[1], [0], [0], [1], [0, 0, 1, 1], [], []>} : vector<16x16xbf16>, vector<16x32xbf16>, vector<16x32xf32> -> vector<16x32xf32>
    %113 = arith.truncf %112 : vector<16x32xf32> to vector<16x32xbf16>
    %c3 = arith.constant 3 : index
    %c0_37 = arith.constant 0 : index
    %c0_38 = arith.constant 0 : index
    %114 = vector.load %arg5[%c3, %c0_37, %c0_38] : memref<4x32x128xbf16, #tpu.memory_space<vmem>>, vector<1x32x128xbf16>
    %115 = vector.shape_cast %114 : vector<1x32x128xbf16> to vector<32x128xbf16>
    %cst_39 = arith.constant dense<0.000000e+00> : vector<16x128xf32>
    %116 = tpu.matmul %113, %115, %cst_39 {dimension_numbers = #tpu.dot_dimension_numbers<[1], [0], [0], [1], [0, 0, 1, 1], [], []>} : vector<16x32xbf16>, vector<32x128xbf16>, vector<16x128xf32> -> vector<16x128xf32>
    %117 = arith.addf %92, %116 : vector<16x128xf32>
    %c0_40 = arith.constant 0 : index
    %c0_41 = arith.constant 0 : index
    %c0_42 = arith.constant 0 : index
    %118 = vector.load %arg7[%c0_40, %c0_41, %c0_42] : memref<1x16x128xf32, #tpu.memory_space<vmem>>, vector<1x16x128xf32>
    %119 = vector.shape_cast %118 : vector<1x16x128xf32> to vector<16x128xf32>
    %120 = vector.shape_cast %117 : vector<16x128xf32> to vector<1x16x128xf32>
    tpu.vector_store %arg7[%c0_40, %c0_41, %c0_42], %120 {strides = array<i32>} : memref<1x16x128xf32, #tpu.memory_space<vmem>>, vector<1x16x128xf32>,
    return
  }
  func.func @transform_0(%arg0: i32) -> (i32, i32, i32) {
    %c0_i32 = arith.constant 0 : i32
    %c0_i32_0 = arith.constant 0 : i32
    %c0_i32_1 = arith.constant 0 : i32
    return %arg0, %c0_i32, %c0_i32_0 : i32, i32, i32
  }
  func.func @transform_1(%arg0: i32) -> (i32, i32, i32) {
    %c0_i32 = arith.constant 0 : i32
    %c0_i32_0 = arith.constant 0 : i32
    %c0_i32_1 = arith.constant 0 : i32
    return %arg0, %c0_i32, %c0_i32_0 : i32, i32, i32
  }
  func.func @transform_2(%arg0: i32) -> (i32, i32) {
    %c0_i32 = arith.constant 0 : i32
    %c0_i32_0 = arith.constant 0 : i32
    %c0_i32_1 = arith.constant 0 : i32
    return %c0_i32, %c0_i32_0 : i32, i32
  }
  func.func @transform_3(%arg0: i32) -> (i32, i32) {
    %c0_i32 = arith.constant 0 : i32
    %c0_i32_0 = arith.constant 0 : i32
    %c0_i32_1 = arith.constant 0 : i32
    return %c0_i32, %c0_i32_0 : i32, i32
  }
  func.func @transform_4(%arg0: i32) -> (i32, i32, i32) {
    %c0_i32 = arith.constant 0 : i32
    %c0_i32_0 = arith.constant 0 : i32
    %c0_i32_1 = arith.constant 0 : i32
    %c0_i32_2 = arith.constant 0 : i32
    return %c0_i32, %c0_i32_0, %c0_i32_1 : i32, i32, i32
  }
  func.func @transform_5(%arg0: i32) -> (i32, i32) {
    %c0_i32 = arith.constant 0 : i32
    %c0_i32_0 = arith.constant 0 : i32
    %c0_i32_1 = arith.constant 0 : i32
    return %c0_i32, %c0_i32_0 : i32, i32
  }
  func.func @transform_6(%arg0: i32) -> (i32, i32, i32) {
    %c0_i32 = arith.constant 0 : i32
    %c0_i32_0 = arith.constant 0 : i32
    %c0_i32_1 = arith.constant 0 : i32
    return %arg0, %c0_i32, %c0_i32_0 : i32, i32, i32
  }
}

</mosaic_0001>

<llo_original>
// kernel: tpu_custom_call.1
$region0: #{tpu_custom_call.1}
  #allocation0 [shape = 'u32[]', space=smem, size = 0x4, offset = 0x4, fixed_abs, tag = 'smem constant byte address 0x4 - core index']
  #allocation1 [shape = 'u32[72,128]{1,0:T(1,128)}', space=vmem, size = 0x9000, scoped, tag = 'internal scratch']
  %s0 = inlined_call_operand.hbm [shape: f32[2,16,128], index: 0, kind: input, shape index: {}]
  %s1 = inlined_call_operand.hbm [shape: f32[2,1,16], index: 1, kind: input, shape index: {}]
  %s2 = inlined_call_operand.hbm [shape: bf16[128,384], index: 2, kind: input, shape index: {}]
  %s3 = inlined_call_operand.hbm [shape: f32[1,384], index: 3, kind: input, shape index: {}]
  %s4 = inlined_call_operand.hbm [shape: bf16[4,32,128], index: 4, kind: input, shape index: {}]
  %s5 = inlined_call_operand.vmem [shape: f32[1,128], index: 5, kind: input, shape index: {}]
  %s6 = inlined_call_operand.hbm [shape: f32[2,16,128], index: 6, kind: output, shape index: {}]
  %s7 = sld [smem:[#allocation0]]
  $region77: #{tpu_custom_call.1} parent=0
    _
  %s9 = ssub.s32 1, %s7
  %s10 = scalar_select 0, %s9, %s7
  $region1: #{tpu_custom_call.1} parent=0
    #allocation2 [shape = 'u8[16384]{0}', space=vmem, size = 0x4000, scoped, tag = 'input window, operand 0']
    #allocation3 [shape = 's32[2]{0}', space=sflag, size = 0x8, scoped, tag = 'scoped memory for tpu_custom_call.1']
    #allocation4 [shape = 's32[2]{0}', space=sflag, size = 0x8, scoped, tag = 'scoped memory for tpu_custom_call.1']
    #allocation5 [shape = 'u8[1024]{0}', space=vmem, size = 0x400, scoped, tag = 'input window, operand 1']
    #allocation6 [shape = 's32[2]{0}', space=sflag, size = 0x8, scoped, tag = 'scoped memory for tpu_custom_call.1']
    #allocation7 [shape = 'u8[98304]{0}', space=vmem, size = 0x18000, scoped, tag = 'input window, operand 2, single buffered']
    #allocation8 [shape = 'u8[1536]{0}', space=vmem, size = 0x800, scoped, tag = 'input window, operand 3, single buffered']
    #allocation9 [shape = 's32[1]{0}', space=sflag, size = 0x4, scoped, tag = 'scoped memory for tpu_custom_call.1']
    #allocation10 [shape = 'u8[32768]{0}', space=vmem, size = 0x8000, scoped, tag = 'input window, operand 4, single buffered']
    #allocation11 [shape = 'u8[16384]{0}', space=vmem, size = 0x4000, scoped, tag = 'output window, operand 0']
    %11 = vsyncpa [#allocation3], 0
    %s12 = scalar_lea.sflag [#allocation3], 1
    %13 = vsyncpa %s12, 0
    %14 = vsyncpa [#allocation6], 0
    %s15 = scalar_lea.sflag [#allocation6], 1
    %16 = vsyncpa %s15, 0
    %17 = vsyncpa [#allocation9], 0
    %18 = vsyncpa [#allocation4], 0
    %s19 = scalar_lea.sflag [#allocation4], 1
    %20 = vsyncpa %s19, 0
    loop: start=0, step=1, limit=4
    $region2: #{tpu_custom_call.1} parent=1 // loop_pre_header
      _
    $region3: #{tpu_custom_call.1} parent=1 // loop_header
      %s22 = sphi 0, %s26
      %p23 = scmp.ge.s32.totalorder %s22, 4
      %s32 = sphi 0, %s34
      %s35 = sphi 0, %s32
      %s36 = sphi 0, %s35
      %s52 = sphi 0, %s36
      %s58 = sphi 0, %s60
      %s61 = sphi 0, %s58
      %s62 = sphi 0, %s61
      %s78 = sphi 0, %s62
      %s82 = sphi 0, %s82
      %s84 = sphi 0, %s82
      %s85 = sphi 0, %s84
      %s99 = sphi 0, %s85
      %s103 = sphi 0, %s103
      %s105 = sphi 0, %s103
      %s106 = sphi 0, %s105
      %s120 = sphi 0, %s106
      %s124 = sphi 0, %s124
      %s126 = sphi 0, %s124
      %s127 = sphi 0, %s126
      %s141 = sphi 0, %s127
      %s145 = sphi 0, %s145
      %s147 = sphi 0, %s145
      %s148 = sphi 0, %s147
      %s162 = sphi 0, %s148
      %s168 = sphi 0, %s170
      %s171 = sphi 0, %s168
      %s172 = sphi 0, %s171
      %s188 = sphi 0, %s172
    $region4: #{tpu_custom_call.1} parent=1 // loop_header_branch
      %25 = sbr.rel (%p23) target = $region8
    $region5: #{tpu_custom_call.1} parent=1 // loop_body
      %s27 = ssub.s32 %s22, 1
      %s28 = ssub.s32 %s22, 2
      %s29 = sadd.s32 %s22, 1
      %s30 = ssub.s32 %s22, %s29
      %p31 = scmp.eq.s32.totalorder %s30, 0
      %s33 = sadd.s32 %s32, 1
      %s34 = scalar_select %p31, %s32, %s33
      %p37 = pneg %p31
      %p38 = scmp.eq.s32.totalorder %s22, 1
      %p39 = por %p37, %p38
      %p40 = scmp.ne.s32.totalorder %s32, %s35
      %p41 = scmp.eq.s32.totalorder %s22, 0
      %p42 = por %p40, %p41
      %p43 = scmp.ne.s32.totalorder %s32, %s35
      %p44 = scmp.eq.s32.totalorder %s27, 1
      %p45 = por %p43, %p44
      %p46 = scmp.ne.s32.totalorder %s35, %s36
      %p47 = scmp.eq.s32.totalorder %s27, 0
      %p48 = por %p46, %p47
      %p49 = scmp.ne.s32.totalorder %s35, %s36
      %p50 = scmp.eq.s32.totalorder %s28, 1
      %p51 = por %p49, %p50
      %p53 = scmp.ne.s32.totalorder %s36, %s52
      %p54 = scmp.eq.s32.totalorder %s28, 0
      %p55 = por %p53, %p54
      %s56 = ssub.s32 %s22, %s29
      %p57 = scmp.eq.s32.totalorder %s56, 0
      %s59 = sadd.s32 %s58, 1
      %s60 = scalar_select %p57, %s58, %s59
      %p63 = pneg %p57
      %p64 = scmp.eq.s32.totalorder %s22, 1
      %p65 = por %p63, %p64
      %p66 = scmp.ne.s32.totalorder %s58, %s61
      %p67 = scmp.eq.s32.totalorder %s22, 0
      %p68 = por %p66, %p67
      %p69 = scmp.ne.s32.totalorder %s58, %s61
      %p70 = scmp.eq.s32.totalorder %s27, 1
      %p71 = por %p69, %p70
      %p72 = scmp.ne.s32.totalorder %s61, %s62
      %p73 = scmp.eq.s32.totalorder %s27, 0
      %p74 = por %p72, %p73
      %p75 = scmp.ne.s32.totalorder %s61, %s62
      %p76 = scmp.eq.s32.totalorder %s28, 1
      %p77 = por %p75, %p76
      %p79 = scmp.ne.s32.totalorder %s62, %s78
      %p80 = scmp.eq.s32.totalorder %s28, 0
      %p81 = por %p79, %p80
      %s83 = sadd.s32 %s82, 1
      %p86 = scmp.eq.s32.totalorder %s22, 1
      %p87 = scmp.ne.s32.totalorder %s82, %s84
      %p88 = scmp.eq.s32.totalorder %s22, 0
      %p89 = por %p87, %p88
      %p90 = scmp.ne.s32.totalorder %s82, %s84
      %p91 = scmp.eq.s32.totalorder %s27, 1
      %p92 = por %p90, %p91
      %p93 = scmp.ne.s32.totalorder %s84, %s85
      %p94 = scmp.eq.s32.totalorder %s27, 0
      %p95 = por %p93, %p94
      %p96 = scmp.ne.s32.totalorder %s84, %s85
      %p97 = scmp.eq.s32.totalorder %s28, 1
      %p98 = por %p96, %p97
      %p100 = scmp.ne.s32.totalorder %s85, %s99
      %p101 = scmp.eq.s32.totalorder %s28, 0
      %p102 = por %p100, %p101
      %s104 = sadd.s32 %s103, 1
      %p107 = scmp.eq.s32.totalorder %s22, 1
      %p108 = scmp.ne.s32.totalorder %s103, %s105
      %p109 = scmp.eq.s32.totalorder %s22, 0
      %p110 = por %p108, %p109
      %p111 = scmp.ne.s32.totalorder %s103, %s105
      %p112 = scmp.eq.s32.totalorder %s27, 1
      %p113 = por %p111, %p112
      %p114 = scmp.ne.s32.totalorder %s105, %s106
      %p115 = scmp.eq.s32.totalorder %s27, 0
      %p116 = por %p114, %p115
      %p117 = scmp.ne.s32.totalorder %s105, %s106
      %p118 = scmp.eq.s32.totalorder %s28, 1
      %p119 = por %p117, %p118
      %p121 = scmp.ne.s32.totalorder %s106, %s120
      %p122 = scmp.eq.s32.totalorder %s28, 0
      %p123 = por %p121, %p122
      %s125 = sadd.s32 %s124, 1
      %p128 = scmp.eq.s32.totalorder %s22, 1
      %p129 = scmp.ne.s32.totalorder %s124, %s126
      %p130 = scmp.eq.s32.totalorder %s22, 0
      %p131 = por %p129, %p130
      %p132 = scmp.ne.s32.totalorder %s124, %s126
      %p133 = scmp.eq.s32.totalorder %s27, 1
      %p134 = por %p132, %p133
      %p135 = scmp.ne.s32.totalorder %s126, %s127
      %p136 = scmp.eq.s32.totalorder %s27, 0
      %p137 = por %p135, %p136
      %p138 = scmp.ne.s32.totalorder %s126, %s127
      %p139 = scmp.eq.s32.totalorder %s28, 1
      %p140 = por %p138, %p139
      %p142 = scmp.ne.s32.totalorder %s127, %s141
      %p143 = scmp.eq.s32.totalorder %s28, 0
      %p144 = por %p142, %p143
      %s146 = sadd.s32 %s145, 1
      %p149 = scmp.eq.s32.totalorder %s22, 1
      %p150 = scmp.ne.s32.totalorder %s145, %s147
      %p151 = scmp.eq.s32.totalorder %s22, 0
      %p152 = por %p150, %p151
      %p153 = scmp.ne.s32.totalorder %s145, %s147
      %p154 = scmp.eq.s32.totalorder %s27, 1
      %p155 = por %p153, %p154
      %p156 = scmp.ne.s32.totalorder %s147, %s148
      %p157 = scmp.eq.s32.totalorder %s27, 0
      %p158 = por %p156, %p157
      %p159 = scmp.ne.s32.totalorder %s147, %s148
      %p160 = scmp.eq.s32.totalorder %s28, 1
      %p161 = por %p159, %p160
      %p163 = scmp.ne.s32.totalorder %s148, %s162
      %p164 = scmp.eq.s32.totalorder %s28, 0
      %p165 = por %p163, %p164
      %s166 = ssub.s32 %s22, %s29
      %p167 = scmp.eq.s32.totalorder %s166, 0
      %s169 = sadd.s32 %s168, 1
      %s170 = scalar_select %p167, %s168, %s169
      %p173 = pneg %p167
      %p174 = scmp.eq.s32.totalorder %s22, 1
      %p175 = por %p173, %p174
      %p176 = scmp.ne.s32.totalorder %s168, %s171
      %p177 = scmp.eq.s32.totalorder %s22, 0
      %p178 = por %p176, %p177
      %p179 = scmp.ne.s32.totalorder %s168, %s171
      %p180 = scmp.eq.s32.totalorder %s27, 1
      %p181 = por %p179, %p180
      %p182 = scmp.ne.s32.totalorder %s171, %s172
      %p183 = scmp.eq.s32.totalorder %s27, 0
      %p184 = por %p182, %p183
      %p185 = scmp.ne.s32.totalorder %s171, %s172
      %p186 = scmp.eq.s32.totalorder %s28, 1
      %p187 = por %p185, %p186
      %p189 = scmp.ne.s32.totalorder %s172, %s188
      %p190 = scmp.eq.s32.totalorder %s28, 0
      %p191 = por %p189, %p190
      %p192 = scmp.le.s32.totalorder 1, %s22
      %p193 = scmp.lt.s32.totalorder %s22, 3
      %p194 = pnand %p192, %p193
      %p195 = pneg %p194
      // Predicated region
      $region9: #{tpu_custom_call.1} parent=5 // pred_check
        _
      $region10: #{tpu_custom_call.1} parent=5 // pred_check_branch
        %197 = sbr.rel (%p194) target = $region12
      $region11: #{tpu_custom_call.1} parent=5 // pred_region
        %s198 = ssub.s32 %s22, 1
        // Predicated region
        $region13: #{tpu_custom_call.1} parent=11 // pred_check
          %p199 = pneg %p95
        $region14: #{tpu_custom_call.1} parent=11 // pred_check_branch
          %201 = sbr.rel (%p199) target = $region16
        $region15: #{tpu_custom_call.1} parent=11 // pred_region
          %203 = vsyncadd [#allocation6], 0
          %s204 = sshll.u32 %s2, 4
          %s205 = int_to_ptr.hbm [resolvable:$true] %s204
          %s206 = sshll.u32 [#allocation7], 4
          %s207 = int_to_ptr.vmem [resolvable:$true] %s206
          %212 = dma.hbm_to_vmem [thread:$0]  %s205, 3072, %s207, [#allocation6], 192, 192, 12
        $region16: #{tpu_custom_call.1} parent=11 // pred_fallthru
          _
        // Predicated region
        $region17: #{tpu_custom_call.1} parent=11 // pred_check
          %p213 = pneg %p116
        $region18: #{tpu_custom_call.1} parent=11 // pred_check_branch
          %215 = sbr.rel (%p213) target = $region20
        $region19: #{tpu_custom_call.1} parent=11 // pred_region
          %217 = vsyncadd [#allocation9], 0
          %s219 = sshll.u32 %s3, 4
          %s220 = int_to_ptr.hbm [resolvable:$true] %s219
          %s221 = sshll.u32 [#allocation8], 4
          %s222 = int_to_ptr.vmem [resolvable:$true] %s221
          %224 = dma.hbm_to_vmem [thread:$0]  %s220, 48, %s222, [#allocation9]
        $region20: #{tpu_custom_call.1} parent=11 // pred_fallthru
          _
        // Predicated region
        $region21: #{tpu_custom_call.1} parent=11 // pred_check
          %p225 = pneg %p137
        $region22: #{tpu_custom_call.1} parent=11 // pred_check_branch
          %227 = sbr.rel (%p225) target = $region24
        $region23: #{tpu_custom_call.1} parent=11 // pred_region
          %229 = vsyncadd [#allocation9], 0
          %s230 = sshll.u32 %s4, 4
          %s231 = int_to_ptr.hbm [resolvable:$true] %s230
          %s232 = sshll.u32 [#allocation10], 4
          %s233 = int_to_ptr.vmem [resolvable:$true] %s232
          %238 = dma.hbm_to_vmem [thread:$0]  %s231, 1024, %s233, [#allocation9], 64, 64, 4
        $region24: #{tpu_custom_call.1} parent=11 // pred_fallthru
          _
        // Predicated region
        $region25: #{tpu_custom_call.1} parent=11 // pred_check
          %p239 = pneg %p158
        $region26: #{tpu_custom_call.1} parent=11 // pred_check_branch
          %241 = sbr.rel (%p239) target = $region28
        $region27: #{tpu_custom_call.1} parent=11 // pred_region
          _
        $region28: #{tpu_custom_call.1} parent=11 // pred_fallthru
          _
      $region12: #{tpu_custom_call.1} parent=5 // pred_fallthru
        _
      %p242 = scmp.lt.s32.totalorder %s22, 2
      // Predicated region
      $region29: #{tpu_custom_call.1} parent=5 // pred_check
        %p243 = pneg %p242
      $region30: #{tpu_custom_call.1} parent=5 // pred_check_branch
        %245 = sbr.rel (%p243) target = $region32
      $region31: #{tpu_custom_call.1} parent=5 // pred_region
        // Predicated region
        $region33: #{tpu_custom_call.1} parent=31 // pred_check
          %p246 = pneg %p42
        $region34: #{tpu_custom_call.1} parent=31 // pred_check_branch
          %248 = sbr.rel (%p246) target = $region36
        $region35: #{tpu_custom_call.1} parent=31 // pred_region
          %s249 = sand.u32 %s32, 1
          %s250 = scalar_lea.sflag [#allocation3], %s249
          %s251 = sand.u32 %s32, 1
          %s252 = smul.addr %s251, 16
          %s253 = scalar_lea.vmem [#allocation2], %s252
          %255 = vsyncadd %s250, 0
          %s256 = smul.addr %s22, 2
          %s257 = smul.addr %s256, 8
          %s258 = scalar_lea.hbm %s0, %s257
          %s259 = sshll.u32 %s258, 4
          %s260 = int_to_ptr.hbm [resolvable:$true] %s259
          %s261 = sshll.u32 %s253, 4
          %s262 = int_to_ptr.vmem [resolvable:$true] %s261
          %267 = dma.hbm_to_vmem [thread:$0]  %s260, 256, %s262, %s250, 128, 128, 8
        $region36: #{tpu_custom_call.1} parent=31 // pred_fallthru
          _
        // Predicated region
        $region37: #{tpu_custom_call.1} parent=31 // pred_check
          %p268 = pneg %p68
        $region38: #{tpu_custom_call.1} parent=31 // pred_check_branch
          %270 = sbr.rel (%p268) target = $region40
        $region39: #{tpu_custom_call.1} parent=31 // pred_region
          %s271 = sand.u32 %s22, 1
          %s272 = scalar_lea.sflag [#allocation6], %s271
          %s273 = sand.u32 %s58, 1
          %s274 = scalar_lea.vmem [#allocation5], %s273
          %276 = vsyncadd %s272, 0
          %s277 = scalar_lea.hbm %s1, %s22
          %s279 = sshll.u32 %s277, 4
          %s280 = int_to_ptr.hbm [resolvable:$true] %s279
          %s281 = sshll.u32 %s274, 4
          %s282 = int_to_ptr.vmem [resolvable:$true] %s281
          %284 = dma.hbm_to_vmem [thread:$0]  %s280, 16, %s282, %s272
        $region40: #{tpu_custom_call.1} parent=31 // pred_fallthru
          _
      $region32: #{tpu_custom_call.1} parent=5 // pred_fallthru
        _
      %p285 = scmp.le.s32.totalorder 1, %s22
      %p286 = scmp.lt.s32.totalorder %s22, 3
      %p287 = pnand %p285, %p286
      %p288 = pneg %p287
      // Predicated region
      $region41: #{tpu_custom_call.1} parent=5 // pred_check
        _
      $region42: #{tpu_custom_call.1} parent=5 // pred_check_branch
        %290 = sbr.rel (%p287) target = $region44
      $region43: #{tpu_custom_call.1} parent=5 // pred_region
        %s291 = ssub.s32 %s22, 1
        %s292 = sand.u32 %s35, 1
        %s293 = scalar_lea.sflag [#allocation3], %s292
        %s294 = sand.u32 %s35, 1
        %s295 = smul.addr %s294, 16
        %s296 = scalar_lea.vmem [#allocation2], %s295
        // Predicated region
        $region45: #{tpu_custom_call.1} parent=43 // pred_check
          %p297 = pneg %p48
        $region46: #{tpu_custom_call.1} parent=43 // pred_check_branch
          %299 = sbr.rel (%p297) target = $region48
        $region47: #{tpu_custom_call.1} parent=43 // pred_region
          %301 = dma.done %s293, 256
        $region48: #{tpu_custom_call.1} parent=43 // pred_fallthru
          _
        %s302 = sand.u32 %s27, 1
        %s303 = scalar_lea.sflag [#allocation6], %s302
        %s304 = sand.u32 %s61, 1
        %s305 = scalar_lea.vmem [#allocation5], %s304
        // Predicated region
        $region49: #{tpu_custom_call.1} parent=43 // pred_check
          %p306 = pneg %p74
        $region50: #{tpu_custom_call.1} parent=43 // pred_check_branch
          %308 = sbr.rel (%p306) target = $region52
        $region51: #{tpu_custom_call.1} parent=43 // pred_region
          %310 = dma.done %s303, 16
        $region52: #{tpu_custom_call.1} parent=43 // pred_fallthru
          _
        // Predicated region
        $region53: #{tpu_custom_call.1} parent=43 // pred_check
          %p311 = pneg %p95
        $region54: #{tpu_custom_call.1} parent=43 // pred_check_branch
          %313 = sbr.rel (%p311) target = $region56
        $region55: #{tpu_custom_call.1} parent=43 // pred_region
          %315 = dma.done [#allocation6], 3072
        $region56: #{tpu_custom_call.1} parent=43 // pred_fallthru
          _
        // Predicated region
        $region57: #{tpu_custom_call.1} parent=43 // pred_check
          %p316 = pneg %p116
        $region58: #{tpu_custom_call.1} parent=43 // pred_check_branch
          %318 = sbr.rel (%p316) target = $region60
        $region59: #{tpu_custom_call.1} parent=43 // pred_region
          %320 = dma.done [#allocation9], 48
        $region60: #{tpu_custom_call.1} parent=43 // pred_fallthru
          _
        // Predicated region
        $region61: #{tpu_custom_call.1} parent=43 // pred_check
          %p321 = pneg %p137
        $region62: #{tpu_custom_call.1} parent=43 // pred_check_branch
          %323 = sbr.rel (%p321) target = $region64
        $region63: #{tpu_custom_call.1} parent=43 // pred_region
          %325 = dma.done [#allocation9], 1024
        $region64: #{tpu_custom_call.1} parent=43 // pred_fallthru
          _
        %s326 = sand.u32 %s35, 1
        %s327 = scalar_lea.sflag [#allocation3], %s326
        %s328 = sand.u32 %s35, 1
        %s329 = smul.addr %s328, 16
        %s330 = scalar_lea.vmem [#allocation2], %s329
        %p331 = pneg %p48
        %p332 = pneg %p45
        %s333 = sand.u32 %s27, 1
        %s334 = scalar_lea.sflag [#allocation6], %s333
        %s335 = sand.u32 %s61, 1
        %s336 = scalar_lea.vmem [#allocation5], %s335
        %p337 = pneg %p74
        %p338 = pneg %p71
        %p339 = pneg %p95
        %p340 = pneg %p92
        %p341 = pneg %p116
        %p342 = pneg %p113
        %p343 = pneg %p137
        %p344 = pneg %p134
        %p345 = pneg %p158
        %p346 = pneg %p155
        %p347 = pneg %p184
        %p348 = pneg %p181
        %s349 = sand.u32 %s171, 1
        %s350 = scalar_lea.sflag [#allocation4], %s349
        %s351 = sand.u32 %s171, 1
        %s352 = smul.addr %s351, 16
        %s353 = scalar_lea.vmem [#allocation11], %s352
        %v355 = vld [vmem:[%s296] sm:$0xff]
        %v356 = vld [vmem:[%s296 + $0x8] sm:$0xff]
        %v357 = vpack.c.bf16 %v356, %v355
        %v358 = vld [vmem:[#allocation7] sm:$0xff]
        %v359 = vld [vmem:[#allocation7 + $0x8] sm:$0xf]
        %v360 = vld [vmem:[#allocation7 + $0xc] sm:$0xff]
        %v361 = vld [vmem:[#allocation7 + $0x14] sm:$0xf]
        %v362 = vld [vmem:[#allocation7 + $0x18] sm:$0xff]
        %v363 = vld [vmem:[#allocation7 + $0x20] sm:$0xf]
        %v364 = vld [vmem:[#allocation7 + $0x24] sm:$0xff]
        %v365 = vld [vmem:[#allocation7 + $0x2c] sm:$0xf]
        %v366 = vld [vmem:[#allocation7 + $0x30] sm:$0xff]
        %v367 = vld [vmem:[#allocation7 + $0x38] sm:$0xf]
        %v368 = vld [vmem:[#allocation7 + $0x3c] sm:$0xff]
        %v369 = vld [vmem:[#allocation7 + $0x44] sm:$0xf]
        %v370 = vld [vmem:[#allocation7 + $0x48] sm:$0xff]
        %v371 = vld [vmem:[#allocation7 + $0x50] sm:$0xf]
        %v372 = vld [vmem:[#allocation7 + $0x54] sm:$0xff]
        %v373 = vld [vmem:[#allocation7 + $0x5c] sm:$0xf]
        %v374 = vld [vmem:[#allocation7 + $0x60] sm:$0xff]
        %v375 = vld [vmem:[#allocation7 + $0x68] sm:$0xf]
        %v376 = vld [vmem:[#allocation7 + $0x6c] sm:$0xff]
        %v377 = vld [vmem:[#allocation7 + $0x74] sm:$0xf]
        %v378 = vld [vmem:[#allocation7 + $0x78] sm:$0xff]
        %v379 = vld [vmem:[#allocation7 + $0x80] sm:$0xf]
        %v380 = vld [vmem:[#allocation7 + $0x84] sm:$0xff]
        %v381 = vld [vmem:[#allocation7 + $0x8c] sm:$0xf]
        %v382 = vld [vmem:[#allocation7 + $0x90] sm:$0xff]
        %v383 = vld [vmem:[#allocation7 + $0x98] sm:$0xf]
        %v384 = vld [vmem:[#allocation7 + $0x9c] sm:$0xff]
        %v385 = vld [vmem:[#allocation7 + $0xa4] sm:$0xf]
        %v386 = vld [vmem:[#allocation7 + $0xa8] sm:$0xff]
        %v387 = vld [vmem:[#allocation7 + $0xb0] sm:$0xf]
        %v388 = vld [vmem:[#allocation7 + $0xb4] sm:$0xff]
        %v389 = vld [vmem:[#allocation7 + $0xbc] sm:$0xf]
        %v390 = vld [vmem:[#allocation8] sm:$0x7]
        %v392 = vperm.slane %v390, 0
        %v393 = vperm.slane %v390, 1
        %v394 = vperm.slane %v390, 2
        %v430 = vunpack.c.l.b16 %v358
        %v431 = vunpack.c.h.b16 %v358
        %v432 = vunpack.c.l.b16 %v359
        %v433 = vunpack.c.l.b16 %v360
        %v434 = vunpack.c.h.b16 %v360
        %v435 = vunpack.c.l.b16 %v361
        %v436 = vunpack.c.l.b16 %v362
        %v437 = vunpack.c.h.b16 %v362
        %v438 = vunpack.c.l.b16 %v363
        %v439 = vunpack.c.l.b16 %v364
        %v440 = vunpack.c.h.b16 %v364
        %v441 = vunpack.c.l.b16 %v365
        %v442 = vunpack.c.l.b16 %v366
        %v443 = vunpack.c.h.b16 %v366
        %v444 = vunpack.c.l.b16 %v367
        %v445 = vunpack.c.l.b16 %v368
        %v446 = vunpack.c.h.b16 %v368
        %v447 = vunpack.c.l.b16 %v369
        %v448 = vunpack.c.l.b16 %v370
        %v449 = vunpack.c.h.b16 %v370
        %v450 = vunpack.c.l.b16 %v371
        %v451 = vunpack.c.l.b16 %v372
        %v452 = vunpack.c.h.b16 %v372
        %v453 = vunpack.c.l.b16 %v373
        %v454 = vunpack.c.l.b16 %v374
        %v455 = vunpack.c.h.b16 %v374
        %v456 = vunpack.c.l.b16 %v375
        %v457 = vunpack.c.l.b16 %v376
        %v458 = vunpack.c.h.b16 %v376
        %v459 = vunpack.c.l.b16 %v377
        %v460 = vunpack.c.l.b16 %v378
        %v461 = vunpack.c.h.b16 %v378
        %v462 = vunpack.c.l.b16 %v379
        %v463 = vunpack.c.l.b16 %v380
        %v464 = vunpack.c.h.b16 %v380
        %v465 = vunpack.c.l.b16 %v381
        %v466 = vunpack.c.l.b16 %v382
        %v467 = vunpack.c.h.b16 %v382
        %v468 = vunpack.c.l.b16 %v383
        %v469 = vunpack.c.l.b16 %v384
        %v470 = vunpack.c.h.b16 %v384
        %v471 = vunpack.c.l.b16 %v385
        %v472 = vunpack.c.l.b16 %v386
        %v473 = vunpack.c.h.b16 %v386
        %v474 = vunpack.c.l.b16 %v387
        %v475 = vunpack.c.l.b16 %v388
        %v476 = vunpack.c.h.b16 %v388
        %v477 = vunpack.c.l.b16 %v389
        %v478 = vpack.c.b16 %v433, %v430
        %v479 = vpack.c.b16 %v434, %v431
        %v480 = vpack.c.b16 %v435, %v432
        %v481 = vpack.c.b16 %v439, %v436
        %v482 = vpack.c.b16 %v440, %v437
        %v483 = vpack.c.b16 %v441, %v438
        %v484 = vpack.c.b16 %v445, %v442
        %v485 = vpack.c.b16 %v446, %v443
        %v486 = vpack.c.b16 %v447, %v444
        %v487 = vpack.c.b16 %v451, %v448
        %v488 = vpack.c.b16 %v452, %v449
        %v489 = vpack.c.b16 %v453, %v450
        %v490 = vpack.c.b16 %v457, %v454
        %v491 = vpack.c.b16 %v458, %v455
        %v492 = vpack.c.b16 %v459, %v456
        %v493 = vpack.c.b16 %v463, %v460
        %v494 = vpack.c.b16 %v464, %v461
        %v495 = vpack.c.b16 %v465, %v462
        %v496 = vpack.c.b16 %v469, %v466
        %v497 = vpack.c.b16 %v470, %v467
        %v498 = vpack.c.b16 %v471, %v468
        %v499 = vpack.c.b16 %v475, %v472
        %v500 = vpack.c.b16 %v476, %v473
        %v501 = vpack.c.b16 %v477, %v474
        %526 = vmatpush.bf16.msra.mxu0 %v499
        %527 = vmatpush.bf16.msra.mxu0 %v496
        %528 = vmatpush.bf16.msra.mxu0 %v493
        %529 = vmatpush.bf16.msra.mxu0 %v490
        %530 = vmatpush.bf16.msra.mxu0 %v487
        %531 = vmatpush.bf16.msra.mxu0 %v484
        %532 = vmatpush.bf16.msra.mxu0 %v481
        %533 = vmatpush.bf16.msra.mxu0 %v478
        %534 = vmatmul.bf16.gmra.mxu0 %v357
        %v535 = vpop.f32.mrf.mxu0
        %v536 = vadd.f32 %v392, %v535
        %v537 = vpop.f32.mrf.mxu0
        %v538 = vadd.f32 %v392, %v537
        %539 = vdwg.mxu0
        %540 = vmatpush.bf16.msra.mxu0 %v500
        %541 = vmatpush.bf16.msra.mxu0 %v497
        %542 = vmatpush.bf16.msra.mxu0 %v494
        %543 = vmatpush.bf16.msra.mxu0 %v491
        %544 = vmatpush.bf16.msra.mxu0 %v488
        %545 = vmatpush.bf16.msra.mxu0 %v485
        %546 = vmatpush.bf16.msra.mxu0 %v482
        %547 = vmatpush.bf16.msra.mxu0 %v479
        %548 = vmatmul.bf16.gmra.mxu0 %v357
        %v549 = vpop.f32.mrf.mxu0
        %v550 = vadd.f32 %v393, %v549
        %v551 = vpop.f32.mrf.mxu0
        %v552 = vadd.f32 %v393, %v551
        %553 = vdwg.mxu0
        %554 = vmatpush.bf16.msra.mxu0 %v501
        %555 = vmatpush.bf16.msra.mxu0 %v498
        %556 = vmatpush.bf16.msra.mxu0 %v495
        %557 = vmatpush.bf16.msra.mxu0 %v492
        %558 = vmatpush.bf16.msra.mxu0 %v489
        %559 = vmatpush.bf16.msra.mxu0 %v486
        %560 = vmatpush.bf16.msra.mxu0 %v483
        %561 = vmatpush.bf16.msra.mxu0 %v480
        %562 = vmatmul.bf16.gmra.mxu0 %v357
        %v563 = vpop.f32.mrf.mxu0
        %v564 = vadd.f32 %v394, %v563
        %v565 = vpop.f32.mrf.mxu0
        %v566 = vadd.f32 %v394, %v565
        %567 = vdwg.mxu0
        %v568 = vld [vmem:[%s305] sm:$0x1]
        %v569 = vld [vmem:[%s5] sm:$0x1]
        %v571 = vperm.slane %v568, 0
        %v574 = vperm.slane %v569, 0
        %v576 = vpack.c.bf16 %v538, %v536
        %v577 = vpack.c.bf16 %v552, %v550
        %v578 = vpack.c.bf16 %v566, %v564
        %vm579 = vcmask 261120
        %v581 = vsel %vm579, %v576, 0
        %v584 = vsel %vm579, %v577, 0
        %586 = vmatpush.bf16.xpose.msra.mxu0 0
        %587 = vmatpush.bf16.xpose.msra.mxu0 0
        %588 = vmatpush.bf16.xpose.msra.mxu0 0
        %589 = vmatpush.bf16.xpose.msra.mxu0 0
        %590 = vmatpush.bf16.xpose.msra.mxu0 0
        %591 = vmatpush.bf16.xpose.msra.mxu0 0
        %592 = vmatpush.bf16.xpose.msra.mxu0 0
        %593 = vmatpush.bf16.xpose.msra.mxu0 %v584
        %594 = vmatmul.bf16.gmra.mxu0 %v581
        %v595 = vpop.f32.mrf.mxu0
        %v596 = vadd.f32 %v571, %v595
        %v597 = vpop.f32.mrf.mxu0
        %v598 = vadd.f32 %v571, %v597
        %599 = vdwg.mxu0
        %vm600 = vcmask 130048
        %v601 = vsel %vm600, %v596, -inf
        %602 = vmax.xlane.f32.xlu0 %v601
        %v603 = vpop.xlane.xlu0 %602
        %v604 = vsel %vm600, %v598, -inf
        %605 = vmax.xlane.f32.xlu0 %v604
        %v606 = vpop.xlane.xlu0 %605
        %v607 = vsub.f32 %v596, %v603
        %v608 = vsub.f32 %v598, %v606
        %v609 = vmul.f32 %v607, 1.442695
        %v610 = vpow.pop %v609
        %v611 = vmul.f32 %v608, 1.442695
        %v612 = vpow.pop %v611
        %v613 = vsel %vm600, %v610, 0.0
        %614 = vadd.xlane.f32.xlu0 %v613
        %v615 = vpop.xlane.xlu0 %614
        %v616 = vsel %vm600, %v612, 0.0
        %617 = vadd.xlane.f32.xlu0 %v616
        %v618 = vpop.xlane.xlu0 %617
        %v619 = vrcp.pop %v615
        %v620 = vrcp.pop %v618
        %v621 = vmul.f32 %v610, %v619
        %v622 = vmul.f32 %v612, %v620
        %v623 = vpack.c.bf16 %v622, %v621
        %v625 = vsel %vm600, %v623, 0
        %627 = vmatpush.bf16.msra.mxu0 0
        %628 = vmatpush.bf16.msra.mxu0 0
        %629 = vmatpush.bf16.msra.mxu0 0
        %630 = vmatpush.bf16.msra.mxu0 0
        %631 = vmatpush.bf16.msra.mxu0 0
        %632 = vmatpush.bf16.msra.mxu0 0
        %633 = vmatpush.bf16.msra.mxu0 0
        %634 = vmatpush.bf16.msra.mxu0 %v578
        %635 = vmatmul.bf16.gmra.mxu0 %v625
        %v636 = vpop.f32.mrf.mxu0
        %v637 = vadd.f32 0.0, %v636
        %v638 = vpop.f32.mrf.mxu0
        %v639 = vadd.f32 0.0, %v638
        %640 = vdwg.mxu0
        %v641 = vpack.c.bf16 %v639, %v637
        %v642 = vld [vmem:[#allocation10] sm:$0xf]
        %v643 = vld [vmem:[#allocation10 + $0x4] sm:$0xf]
        %v644 = vld [vmem:[#allocation10 + $0x8] sm:$0xf]
        %v645 = vld [vmem:[#allocation10 + $0xc] sm:$0xf]
        %v650 = vunpack.c.l.b16 %v642
        %v651 = vunpack.c.l.b16 %v643
        %v652 = vunpack.c.l.b16 %v644
        %v653 = vunpack.c.l.b16 %v645
        %v654 = vpack.c.b16 %v651, %v650
        %v655 = vpack.c.b16 %v653, %v652
        %v659 = vsel %vm579, %v641, 0
        %661 = vmatpush.bf16.msra.mxu0 0
        %662 = vmatpush.bf16.msra.mxu0 0
        %663 = vmatpush.bf16.msra.mxu0 0
        %664 = vmatpush.bf16.msra.mxu0 0
        %665 = vmatpush.bf16.msra.mxu0 0
        %666 = vmatpush.bf16.msra.mxu0 0
        %667 = vmatpush.bf16.msra.mxu0 %v655
        %668 = vmatpush.bf16.msra.mxu0 %v654
        %669 = vmatmul.bf16.gmra.mxu0 %v659
        %v670 = vpop.f32.mrf.mxu0
        %v671 = vadd.f32 0.0, %v670
        %v672 = vpop.f32.mrf.mxu0
        %v673 = vadd.f32 0.0, %v672
        %674 = vdwg.mxu0
        %v675 = vadd.f32 %v574, %v671
        %v676 = vadd.f32 %v574, %v673
        %678 = vrot.lane.b32.xlu0 %v576, 96
        %v679 = vpop.permute.xlu0 %678
        %681 = vrot.lane.b32.xlu0 %v577, 96
        %v682 = vpop.permute.xlu0 %681
        %v684 = vsel %vm579, %v679, 0
        %v687 = vsel %vm579, %v682, 0
        %689 = vmatpush.bf16.xpose.msra.mxu0 0
        %690 = vmatpush.bf16.xpose.msra.mxu0 0
        %691 = vmatpush.bf16.xpose.msra.mxu0 0
        %692 = vmatpush.bf16.xpose.msra.mxu0 0
        %693 = vmatpush.bf16.xpose.msra.mxu0 0
        %694 = vmatpush.bf16.xpose.msra.mxu0 0
        %695 = vmatpush.bf16.xpose.msra.mxu0 0
        %696 = vmatpush.bf16.xpose.msra.mxu0 %v687
        %697 = vmatmul.bf16.gmra.mxu0 %v684
        %v698 = vpop.f32.mrf.mxu0
        %v699 = vadd.f32 %v571, %v698
        %v700 = vpop.f32.mrf.mxu0
        %v701 = vadd.f32 %v571, %v700
        %702 = vdwg.mxu0
        %v703 = vsel %vm600, %v699, -inf
        %704 = vmax.xlane.f32.xlu0 %v703
        %v705 = vpop.xlane.xlu0 %704
        %v706 = vsel %vm600, %v701, -inf
        %707 = vmax.xlane.f32.xlu0 %v706
        %v708 = vpop.xlane.xlu0 %707
        %v709 = vsub.f32 %v699, %v705
        %v710 = vsub.f32 %v701, %v708
        %v711 = vmul.f32 %v709, 1.442695
        %v712 = vpow.pop %v711
        %v713 = vmul.f32 %v710, 1.442695
        %v714 = vpow.pop %v713
        %v715 = vsel %vm600, %v712, 0.0
        %716 = vadd.xlane.f32.xlu0 %v715
        %v717 = vpop.xlane.xlu0 %716
        %v718 = vsel %vm600, %v714, 0.0
        %719 = vadd.xlane.f32.xlu0 %v718
        %v720 = vpop.xlane.xlu0 %719
        %v721 = vrcp.pop %v717
        %v722 = vrcp.pop %v720
        %v723 = vmul.f32 %v712, %v721
        %v724 = vmul.f32 %v714, %v722
        %v725 = vpack.c.bf16 %v724, %v723
        %727 = vrot.lane.b32.xlu0 %v578, 96
        %v728 = vpop.permute.xlu0 %727
        %v731 = vsel %vm600, %v725, 0
        %733 = vmatpush.bf16.msra.mxu0 0
        %734 = vmatpush.bf16.msra.mxu0 0
        %735 = vmatpush.bf16.msra.mxu0 0
        %736 = vmatpush.bf16.msra.mxu0 0
        %737 = vmatpush.bf16.msra.mxu0 0
        %738 = vmatpush.bf16.msra.mxu0 0
        %739 = vmatpush.bf16.msra.mxu0 0
        %740 = vmatpush.bf16.msra.mxu0 %v728
        %741 = vmatmul.bf16.gmra.mxu0 %v731
        %v742 = vpop.f32.mrf.mxu0
        %v743 = vadd.f32 0.0, %v742
        %v744 = vpop.f32.mrf.mxu0
        %v745 = vadd.f32 0.0, %v744
        %746 = vdwg.mxu0
        %v747 = vpack.c.bf16 %v745, %v743
        %s748 = scalar_lea.vmem [#allocation10], 16
        %v749 = vld [vmem:[%s748] sm:$0xf]
        %v750 = vld [vmem:[%s748 + $0x4] sm:$0xf]
        %v751 = vld [vmem:[%s748 + $0x8] sm:$0xf]
        %v752 = vld [vmem:[%s748 + $0xc] sm:$0xf]
        %v757 = vunpack.c.l.b16 %v749
        %v758 = vunpack.c.l.b16 %v750
        %v759 = vunpack.c.l.b16 %v751
        %v760 = vunpack.c.l.b16 %v752
        %v761 = vpack.c.b16 %v758, %v757
        %v762 = vpack.c.b16 %v760, %v759
        %v766 = vsel %vm579, %v747, 0
        %768 = vmatpush.bf16.msra.mxu0 0
        %769 = vmatpush.bf16.msra.mxu0 0
        %770 = vmatpush.bf16.msra.mxu0 0
        %771 = vmatpush.bf16.msra.mxu0 0
        %772 = vmatpush.bf16.msra.mxu0 0
        %773 = vmatpush.bf16.msra.mxu0 0
        %774 = vmatpush.bf16.msra.mxu0 %v762
        %775 = vmatpush.bf16.msra.mxu0 %v761
        %776 = vmatmul.bf16.gmra.mxu0 %v766
        %v777 = vpop.f32.mrf.mxu0
        %v778 = vadd.f32 0.0, %v777
        %v779 = vpop.f32.mrf.mxu0
        %v780 = vadd.f32 0.0, %v779
        %781 = vdwg.mxu0
        %v782 = vadd.f32 %v675, %v778
        %v783 = vadd.f32 %v676, %v780
        %784 = vrot.lane.b32.xlu0 %v576, 64
        %v785 = vpop.permute.xlu0 %784
        %786 = vrot.lane.b32.xlu0 %v577, 64
        %v787 = vpop.permute.xlu0 %786
        %v789 = vsel %vm579, %v785, 0
        %v792 = vsel %vm579, %v787, 0
        %794 = vmatpush.bf16.xpose.msra.mxu0 0
        %795 = vmatpush.bf16.xpose.msra.mxu0 0
        %796 = vmatpush.bf16.xpose.msra.mxu0 0
        %797 = vmatpush.bf16.xpose.msra.mxu0 0
        %798 = vmatpush.bf16.xpose.msra.mxu0 0
        %799 = vmatpush.bf16.xpose.msra.mxu0 0
        %800 = vmatpush.bf16.xpose.msra.mxu0 0
        %801 = vmatpush.bf16.xpose.msra.mxu0 %v792
        %802 = vmatmul.bf16.gmra.mxu0 %v789
        %v803 = vpop.f32.mrf.mxu0
        %v804 = vadd.f32 %v571, %v803
        %v805 = vpop.f32.mrf.mxu0
        %v806 = vadd.f32 %v571, %v805
        %807 = vdwg.mxu0
        %v808 = vsel %vm600, %v804, -inf
        %809 = vmax.xlane.f32.xlu0 %v808
        %v810 = vpop.xlane.xlu0 %809
        %v811 = vsel %vm600, %v806, -inf
        %812 = vmax.xlane.f32.xlu0 %v811
        %v813 = vpop.xlane.xlu0 %812
        %v814 = vsub.f32 %v804, %v810
        %v815 = vsub.f32 %v806, %v813
        %v816 = vmul.f32 %v814, 1.442695
        %v817 = vpow.pop %v816
        %v818 = vmul.f32 %v815, 1.442695
        %v819 = vpow.pop %v818
        %v820 = vsel %vm600, %v817, 0.0
        %821 = vadd.xlane.f32.xlu0 %v820
        %v822 = vpop.xlane.xlu0 %821
        %v823 = vsel %vm600, %v819, 0.0
        %824 = vadd.xlane.f32.xlu0 %v823
        %v825 = vpop.xlane.xlu0 %824
        %v826 = vrcp.pop %v822
        %v827 = vrcp.pop %v825
        %v828 = vmul.f32 %v817, %v826
        %v829 = vmul.f32 %v819, %v827
        %v830 = vpack.c.bf16 %v829, %v828
        %831 = vrot.lane.b32.xlu0 %v578, 64
        %v832 = vpop.permute.xlu0 %831
        %v835 = vsel %vm600, %v830, 0
        %837 = vmatpush.bf16.msra.mxu0 0
        %838 = vmatpush.bf16.msra.mxu0 0
        %839 = vmatpush.bf16.msra.mxu0 0
        %840 = vmatpush.bf16.msra.mxu0 0
        %841 = vmatpush.bf16.msra.mxu0 0
        %842 = vmatpush.bf16.msra.mxu0 0
        %843 = vmatpush.bf16.msra.mxu0 0
        %844 = vmatpush.bf16.msra.mxu0 %v832
        %845 = vmatmul.bf16.gmra.mxu0 %v835
        %v846 = vpop.f32.mrf.mxu0
        %v847 = vadd.f32 0.0, %v846
        %v848 = vpop.f32.mrf.mxu0
        %v849 = vadd.f32 0.0, %v848
        %850 = vdwg.mxu0
        %v851 = vpack.c.bf16 %v849, %v847
        %s852 = scalar_lea.vmem [#allocation10], 32
        %v853 = vld [vmem:[%s852] sm:$0xf]
        %v854 = vld [vmem:[%s852 + $0x4] sm:$0xf]
        %v855 = vld [vmem:[%s852 + $0x8] sm:$0xf]
        %v856 = vld [vmem:[%s852 + $0xc] sm:$0xf]
        %v861 = vunpack.c.l.b16 %v853
        %v862 = vunpack.c.l.b16 %v854
        %v863 = vunpack.c.l.b16 %v855
        %v864 = vunpack.c.l.b16 %v856
        %v865 = vpack.c.b16 %v862, %v861
        %v866 = vpack.c.b16 %v864, %v863
        %v870 = vsel %vm579, %v851, 0
        %872 = vmatpush.bf16.msra.mxu0 0
        %873 = vmatpush.bf16.msra.mxu0 0
        %874 = vmatpush.bf16.msra.mxu0 0
        %875 = vmatpush.bf16.msra.mxu0 0
        %876 = vmatpush.bf16.msra.mxu0 0
        %877 = vmatpush.bf16.msra.mxu0 0
        %878 = vmatpush.bf16.msra.mxu0 %v866
        %879 = vmatpush.bf16.msra.mxu0 %v865
        %880 = vmatmul.bf16.gmra.mxu0 %v870
        %v881 = vpop.f32.mrf.mxu0
        %v882 = vadd.f32 0.0, %v881
        %v883 = vpop.f32.mrf.mxu0
        %v884 = vadd.f32 0.0, %v883
        %885 = vdwg.mxu0
        %v886 = vadd.f32 %v782, %v882
        %v887 = vadd.f32 %v783, %v884
        %888 = vrot.lane.b32.xlu0 %v576, 32
        %v889 = vpop.permute.xlu0 %888
        %890 = vrot.lane.b32.xlu0 %v577, 32
        %v891 = vpop.permute.xlu0 %890
        %v893 = vsel %vm579, %v889, 0
        %v896 = vsel %vm579, %v891, 0
        %898 = vmatpush.bf16.xpose.msra.mxu0 0
        %899 = vmatpush.bf16.xpose.msra.mxu0 0
        %900 = vmatpush.bf16.xpose.msra.mxu0 0
        %901 = vmatpush.bf16.xpose.msra.mxu0 0
        %902 = vmatpush.bf16.xpose.msra.mxu0 0
        %903 = vmatpush.bf16.xpose.msra.mxu0 0
        %904 = vmatpush.bf16.xpose.msra.mxu0 0
        %905 = vmatpush.bf16.xpose.msra.mxu0 %v896
        %906 = vmatmul.bf16.gmra.mxu0 %v893
        %v907 = vpop.f32.mrf.mxu0
        %v908 = vadd.f32 %v571, %v907
        %v909 = vpop.f32.mrf.mxu0
        %v910 = vadd.f32 %v571, %v909
        %911 = vdwg.mxu0
        %v912 = vsel %vm600, %v908, -inf
        %913 = vmax.xlane.f32.xlu0 %v912
        %v914 = vpop.xlane.xlu0 %913
        %v915 = vsel %vm600, %v910, -inf
        %916 = vmax.xlane.f32.xlu0 %v915
        %v917 = vpop.xlane.xlu0 %916
        %v918 = vsub.f32 %v908, %v914
        %v919 = vsub.f32 %v910, %v917
        %v920 = vmul.f32 %v918, 1.442695
        %v921 = vpow.pop %v920
        %v922 = vmul.f32 %v919, 1.442695
        %v923 = vpow.pop %v922
        %v924 = vsel %vm600, %v921, 0.0
        %925 = vadd.xlane.f32.xlu0 %v924
        %v926 = vpop.xlane.xlu0 %925
        %v927 = vsel %vm600, %v923, 0.0
        %928 = vadd.xlane.f32.xlu0 %v927
        %v929 = vpop.xlane.xlu0 %928
        %v930 = vrcp.pop %v926
        %v931 = vrcp.pop %v929
        %v932 = vmul.f32 %v921, %v930
        %v933 = vmul.f32 %v923, %v931
        %v934 = vpack.c.bf16 %v933, %v932
        %935 = vrot.lane.b32.xlu0 %v578, 32
        %v936 = vpop.permute.xlu0 %935
        %v939 = vsel %vm600, %v934, 0
        %941 = vmatpush.bf16.msra.mxu0 0
        %942 = vmatpush.bf16.msra.mxu0 0
        %943 = vmatpush.bf16.msra.mxu0 0
        %944 = vmatpush.bf16.msra.mxu0 0
        %945 = vmatpush.bf16.msra.mxu0 0
        %946 = vmatpush.bf16.msra.mxu0 0
        %947 = vmatpush.bf16.msra.mxu0 0
        %948 = vmatpush.bf16.msra.mxu0 %v936
        %949 = vmatmul.bf16.gmra.mxu0 %v939
        %v950 = vpop.f32.mrf.mxu0
        %v951 = vadd.f32 0.0, %v950
        %v952 = vpop.f32.mrf.mxu0
        %v953 = vadd.f32 0.0, %v952
        %954 = vdwg.mxu0
        %v955 = vpack.c.bf16 %v953, %v951
        %s956 = scalar_lea.vmem [#allocation10], 48
        %v957 = vld [vmem:[%s956] sm:$0xf]
        %v958 = vld [vmem:[%s956 + $0x4] sm:$0xf]
        %v959 = vld [vmem:[%s956 + $0x8] sm:$0xf]
        %v960 = vld [vmem:[%s956 + $0xc] sm:$0xf]
        %v965 = vunpack.c.l.b16 %v957
        %v966 = vunpack.c.l.b16 %v958
        %v967 = vunpack.c.l.b16 %v959
        %v968 = vunpack.c.l.b16 %v960
        %v969 = vpack.c.b16 %v966, %v965
        %v970 = vpack.c.b16 %v968, %v967
        %v974 = vsel %vm579, %v955, 0
        %976 = vmatpush.bf16.msra.mxu0 0
        %977 = vmatpush.bf16.msra.mxu0 0
        %978 = vmatpush.bf16.msra.mxu0 0
        %979 = vmatpush.bf16.msra.mxu0 0
        %980 = vmatpush.bf16.msra.mxu0 0
        %981 = vmatpush.bf16.msra.mxu0 0
        %982 = vmatpush.bf16.msra.mxu0 %v970
        %983 = vmatpush.bf16.msra.mxu0 %v969
        %984 = vmatmul.bf16.gmra.mxu0 %v974
        %v985 = vpop.f32.mrf.mxu0
        %v986 = vadd.f32 0.0, %v985
        %v987 = vpop.f32.mrf.mxu0
        %v988 = vadd.f32 0.0, %v987
        %989 = vdwg.mxu0
        %v990 = vadd.f32 %v886, %v986
        %v991 = vadd.f32 %v887, %v988
        %992 = vst [vmem:[%s353] sm:$0xff] %v990
        %993 = vst [vmem:[%s353 + $0x8] sm:$0xff] %v991
        %s994 = sand.u32 %s171, 1
        %s995 = scalar_lea.sflag [#allocation4], %s994
        %s996 = sand.u32 %s171, 1
        %s997 = smul.addr %s996, 16
        %s998 = scalar_lea.vmem [#allocation11], %s997
        // Predicated region
        $region65: #{tpu_custom_call.1} parent=43 // pred_check
          %p999 = pneg %p181
        $region66: #{tpu_custom_call.1} parent=43 // pred_check_branch
          %1001 = sbr.rel (%p999) target = $region68
        $region67: #{tpu_custom_call.1} parent=43 // pred_region
          %1003 = vsyncadd %s995, 0
          %s1004 = smul.addr %s27, 2
          %s1005 = smul.addr %s1004, 8
          %s1006 = scalar_lea.hbm %s6, %s1005
          %s1007 = sshll.u32 %s998, 4
          %s1008 = int_to_ptr.vmem [resolvable:$true] %s1007
          %s1009 = sshll.u32 %s1006, 4
          %s1010 = int_to_ptr.hbm [resolvable:$true] %s1009
          %1015 = dma.vmem_to_hbm [thread:$0]  %s1008, 256, %s1010, %s995, 128, 128, 8
        $region68: #{tpu_custom_call.1} parent=43 // pred_fallthru
          _
      $region44: #{tpu_custom_call.1} parent=5 // pred_fallthru
        _
      %p1016 = scmp.le.s32.totalorder 2, %s22
      // Predicated region
      $region69: #{tpu_custom_call.1} parent=5 // pred_check
        %p1017 = pneg %p1016
      $region70: #{tpu_custom_call.1} parent=5 // pred_check_branch
        %1019 = sbr.rel (%p1017) target = $region72
      $region71: #{tpu_custom_call.1} parent=5 // pred_region
        %s1020 = ssub.s32 %s22, 2
        // Predicated region
        $region73: #{tpu_custom_call.1} parent=71 // pred_check
          %p1021 = pneg %p187
        $region74: #{tpu_custom_call.1} parent=71 // pred_check_branch
          %1023 = sbr.rel (%p1021) target = $region76
        $region75: #{tpu_custom_call.1} parent=71 // pred_region
          %s1024 = sand.u32 %s172, 1
          %s1025 = scalar_lea.sflag [#allocation4], %s1024
          %s1026 = sand.u32 %s172, 1
          %s1027 = smul.addr %s1026, 16
          %s1028 = scalar_lea.vmem [#allocation11], %s1027
          %1030 = dma.done %s1025, 256
        $region76: #{tpu_custom_call.1} parent=71 // pred_fallthru
          _
      $region72: #{tpu_custom_call.1} parent=5 // pred_fallthru
        _
    $region6: #{tpu_custom_call.1} parent=1 // loop_footer
      %s26 = sadd.s32 1, %s22
    $region7: #{tpu_custom_call.1} parent=1 // loop_footer_branch
      %21 = sbr.rel target = $region3
    $region8: #{tpu_custom_call.1} parent=1 // loop_exit
      _
    %1031 = vsyncpa [#allocation3], 1
    %s1032 = scalar_lea.sflag [#allocation3], 1
    %1033 = vsyncpa %s1032, 1
    %1034 = vsyncpa [#allocation6], 1
    %s1035 = scalar_lea.sflag [#allocation6], 1
    %1036 = vsyncpa %s1035, 1
    %1037 = vsyncpa [#allocation9], 1
    %1038 = vsyncpa [#allocation4], 1
    %s1039 = scalar_lea.sflag [#allocation4], 1
    %1040 = vsyncpa %s1039, 1

</llo_original>
